<compile_context>
chip_gen: v7x
topology: tpu7x:2x2x1
jax: 0.10.0
libtpu: 0.0.40
codegen_flags: <defaults>
</compile_context>

<pallas_src>
import functools

import jax
import jax.numpy as jnp
import numpy as np
from jax.experimental import pallas as pl
from jax.experimental.pallas import tpu as pltpu

EPS = 1e-5        # nn.LayerNorm default
NEG_INF = -1e30   # block-diagonal batch mask (finite to avoid inf-inf NaNs)


def _layernorm_f32(x, gamma, beta):
    x = x.astype(jnp.float32)
    mu = jnp.mean(x, axis=-1, keepdims=True)
    var = jnp.mean((x - mu) ** 2, axis=-1, keepdims=True)
    return (x - mu) * jax.lax.rsqrt(var + EPS) * gamma + beta


# ---------------------------------------------------------------------------
# Mapper linear: x (B, dim_clip) @ W (dim_clip, clip_len*c) + b
# ---------------------------------------------------------------------------
def mapper_linear_kernel(x_ref, w_ref, b_ref, o_ref):
    x = x_ref[...].astype(jnp.bfloat16)
    o_ref[...] = (
        jnp.dot(x, w_ref[...], preferred_element_type=jnp.float32) + b_ref[...]
    )


def mapper_linear(x, w_bf16, b):
    B, K = x.shape
    N = w_bf16.shape[1]

    # Pad rows to a multiple of 8 sublanes (unmasked stores / MXU M minimum).
    Bp = ((B + 7) // 8) * 8
    if Bp != B:
        x = jnp.concatenate([x, jnp.zeros((Bp - B, K), x.dtype)], axis=0)

    # Largest lane-dense column tile that keeps double-buffered inputs + outputs
    # within a conservative VMEM budget; full N => a single grid step.
    budget = 8 * 1024 * 1024

    def bytes_for(t):
        return Bp * K * 4 + 2 * (K * t * 2 + t * 4) + 2 * Bp * t * 4

    tn = N
    if bytes_for(N) > budget:
        divisors = [t for t in (4096, 2048, 1024, 512, 256, 128) if N % t == 0]
        fitting = [t for t in divisors if bytes_for(t) <= budget]
        if fitting:
            tn = fitting[0]
        elif divisors:
            tn = divisors[-1]

    out = pl.pallas_call(
        mapper_linear_kernel,
        grid=(N // tn,),
        in_specs=[
            pl.BlockSpec((Bp, K), lambda j: (0, 0)),
            pl.BlockSpec((K, tn), lambda j: (0, j)),
            pl.BlockSpec((1, tn), lambda j: (0, j)),
        ],
        out_specs=pl.BlockSpec((Bp, tn), lambda j: (0, j)),
        out_shape=jax.ShapeDtypeStruct((Bp, N), jnp.float32),
        compiler_params=pltpu.CompilerParams(dimension_semantics=("parallel",)),
    )(x, w_bf16, b)
    return out[:B]


# ---------------------------------------------------------------------------
# Fused transformer stack: one kernel invocation per (batch_block, layer)
# ---------------------------------------------------------------------------
def transformer_stack_kernel(
    hmq_ref,                                  # (H, c) f32 head mask * 1/sqrt(dh)
    hmo_ref,                                  # (H, c) f32 head mask
    bias_ref,                                 # (Mb, Mb) f32 block-diag batch bias
    z_ref,                                    # (Mb, c) f32 initial activation
    vec_ref,                                  # (1, 8, W) f32 packed small vectors
    wqkv_ref,                                 # (1, c, 3c) bf16  [Wq | Wk | Wv]
    wp_ref,                                   # (1, c, c) bf16
    w1_ref,                                   # (1, c, hdim) bf16
    w2_ref,                                   # (1, hdim, c) bf16
    o_ref,                                    # (Mb, c) f32 resident activation / output
    *,
    num_heads,
):
    layer = pl.program_id(1)

    @pl.when(layer == 0)
    def _():                                   # load initial activation once
        o_ref[...] = z_ref[...]

    x = o_ref[...]                             # (Mb, c) f32, resident across layers
    Mb, c = x.shape
    H = num_heads
    hdim = w1_ref.shape[2]

    # packed per-layer small vectors: [g1, be1, bp, g2, be2, b1, b2, 0]
    vec = vec_ref[0]                           # (8, W) f32
    g1, be1 = vec[0:1, :c], vec[1:2, :c]
    bp = vec[2:3, :c]
    g2, be2 = vec[3:4, :c], vec[4:5, :c]
    b1 = vec[5:6, :hdim]
    b2 = vec[6:7, :c]

    # ---- pre-norm multi-head self-attention + residual ----
    xn = _layernorm_f32(x, g1, be1)
    qkv = jnp.dot(xn.astype(jnp.bfloat16), wqkv_ref[0],
                  preferred_element_type=jnp.float32)          # (Mb, 3c)
    q = qkv[:, :c]
    k = qkv[:, c:2 * c]
    v = qkv[:, 2 * c:]

    # per-head scores via head-channel masking (scale folded into hmq):
    # one (H*Mb, c) x (Mb, c)^T matmul
    hmq = hmq_ref[...]
    qm = (q[None, :, :] * hmq[:, None, :]).reshape(H * Mb, c)
    s = jax.lax.dot_general(
        qm.astype(jnp.bfloat16), k.astype(jnp.bfloat16),
        dimension_numbers=(((1,), (1,)), ((), ())),
        preferred_element_type=jnp.float32,
    ).reshape(H, Mb, Mb) + bias_ref[...][None, :, :]

    # softmax: f32 statistics; unnormalized exp goes straight into the PV
    # matmul in bf16, normalization applied to the (smaller) matmul result.
    m = jnp.max(s, axis=-1, keepdims=True)
    e = jnp.exp(s - m)
    denom = jnp.sum(e, axis=-1, keepdims=True)
    recip = pl.reciprocal(denom, approx=True)                  # (H, Mb, 1), EUP

    o_heads = jnp.dot(
        e.reshape(H * Mb, Mb).astype(jnp.bfloat16),
        v.astype(jnp.bfloat16),
        preferred_element_type=jnp.float32,
    ).reshape(H, Mb, c)
    hmo = hmo_ref[...]
    attn = jnp.sum(o_heads * recip * hmo[:, None, :], axis=0)  # (Mb, c)

    attn = jnp.dot(attn.astype(jnp.bfloat16), wp_ref[0],
                   preferred_element_type=jnp.float32) + bp
    x = x + attn

    # ---- pre-norm MLP (ReLU) + residual ----
    xn2 = _layernorm_f32(x, g2, be2)
    h1 = jnp.dot(xn2.astype(jnp.bfloat16), w1_ref[0],
                 preferred_element_type=jnp.float32) + b1
    h1 = jnp.maximum(h1, 0.0)
    mlp = jnp.dot(h1.astype(jnp.bfloat16), w2_ref[0],
                  preferred_element_type=jnp.float32) + b2

    o_ref[...] = x + mlp


def transformer_stack(z0, layers, *, num_heads, tokens_per_batch, batch_blocks=1):
    M, c = z0.shape
    L = layers["wqkv"].shape[0]
    hdim = layers["w1"].shape[2]
    W = layers["vec"].shape[2]
    assert c % num_heads == 0, "dim_embedding must be divisible by num_heads"
    assert M % batch_blocks == 0
    Mb = M // batch_blocks
    assert Mb % tokens_per_batch == 0 and Mb % 8 == 0

    # layer-invariant constants, built once host-side (no per-layer VPU work)
    dh = c // num_heads
    scale = dh ** (-0.5)
    lane = np.arange(c)[None, :]
    hsel = np.arange(num_heads)[:, None]
    head_mask = (lane // dh == hsel).astype(np.float32)          # (H, c)
    hmask_q = jnp.asarray(head_mask * scale)                     # scale folded in
    hmask_o = jnp.asarray(head_mask)
    row = np.arange(Mb)[:, None] // tokens_per_batch
    col = np.arange(Mb)[None, :] // tokens_per_batch
    batch_bias = jnp.asarray(
        np.where(row == col, 0.0, NEG_INF).astype(np.float32))   # (Mb, Mb)

    act_spec = pl.BlockSpec((Mb, c), lambda b, l: (b, 0))
    const2d = lambda shape: pl.BlockSpec(shape, lambda b, l: (0, 0))
    wspec = lambda shape: pl.BlockSpec((1,) + shape, lambda b, l: (l, 0, 0))

    kernel = functools.partial(transformer_stack_kernel, num_heads=num_heads)
    return pl.pallas_call(
        kernel,
        grid=(batch_blocks, L),                 # layers innermost ("arbitrary")
        in_specs=[
            const2d((num_heads, c)),
            const2d((num_heads, c)),
            const2d((Mb, Mb)),
            act_spec,
            wspec((8, W)),
            wspec((c, 3 * c)),
            wspec((c, c)),
            wspec((c, hdim)),
            wspec((hdim, c)),
        ],
        out_specs=act_spec,
        out_shape=jax.ShapeDtypeStruct((M, c), jnp.float32),
        compiler_params=pltpu.CompilerParams(
            dimension_semantics=("parallel", "arbitrary"),
            vmem_limit_bytes=48 * 1024 * 1024),
    )(
        hmask_q, hmask_o, batch_bias, z0,
        layers["vec"], layers["wqkv"], layers["wp"], layers["w1"], layers["w2"],
    )


# ---------------------------------------------------------------------------
# Parameter init (deterministic, synthetic; weights bf16, stacked over layers)
# ---------------------------------------------------------------------------
def init_params(key, dim_clip, dim_embedding, clip_length, prefix_length,
                num_layers, num_heads, mlp_ratio):
    c = dim_embedding
    hdim = int(c * mlp_ratio)
    W = max(c, hdim)
    keys = jax.random.split(key, 2 + 5 * num_layers)
    kit = iter(keys)

    def w(k, shape, std=0.02):
        return (std * jax.random.normal(k, shape)).astype(jnp.bfloat16)

    params = {
        "lin_w": w(next(kit), (dim_clip, clip_length * c)),     # pre-transposed
        "lin_b": jnp.zeros((1, clip_length * c), jnp.float32),
        "prefix_const": jax.random.normal(
            next(kit), (prefix_length, c)).astype(jnp.float32),  # torch.randn
    }
    wqkv_l, wp_l, w1_l, w2_l = [], [], [], []
    for _ in range(num_layers):
        wq = w(next(kit), (c, c))
        wkv = w(next(kit), (c, 2 * c))
        wqkv_l.append(jnp.concatenate([wq, wkv], axis=1))       # [Wq | Wk | Wv]
        wp_l.append(w(next(kit), (c, c)))
        w1_l.append(w(next(kit), (c, hdim)))
        w2_l.append(w(next(kit), (hdim, c)))

    # packed small per-layer vectors: rows [g1, be1, bp, g2, be2, b1, b2, 0]
    vec = jnp.zeros((num_layers, 8, W), jnp.float32)
    vec = vec.at[:, 0, :c].set(1.0)   # g1 (LayerNorm weight)
    vec = vec.at[:, 3, :c].set(1.0)   # g2
    # rows 1,2,4,5,6 are zero-initialized biases (matches nn.Linear zero-bias
    # synthetic init here); row 7 is padding.

    params["layers"] = {
        "vec": vec,
        "wqkv": jnp.stack(wqkv_l),
        "wp": jnp.stack(wp_l),
        "w1": jnp.stack(w1_l),
        "w2": jnp.stack(w2_l),
    }
    return params


# ---------------------------------------------------------------------------
# TransformerMapper forward (Pallas path)
# ---------------------------------------------------------------------------
def transformer_mapper(x, params, clip_length, dim_embedding, num_heads,
                       batch_blocks=1):
    B = x.shape[0]
    h = mapper_linear(x, params["lin_w"], params["lin_b"])      # (B, L*C)
    h = h.reshape(B, clip_length, dim_embedding)
    prefix = jnp.broadcast_to(
        params["prefix_const"][None], (B,) + params["prefix_const"].shape)
    z = jnp.concatenate([h, prefix], axis=1)                    # (B, n, C)
    n = z.shape[1]
    y = transformer_stack(
        z.reshape(B * n, dim_embedding), params["layers"],
        num_heads=num_heads, tokens_per_batch=n, batch_blocks=batch_blocks)
    return y.reshape(B, n, dim_embedding)[:, clip_length:]      # (B, P, C)


# ---------------------------------------------------------------------------
# Pure-JAX f32 reference (mirrors the PyTorch einsum formulation)
# ---------------------------------------------------------------------------
def _ref_layer(x, lp, li, num_heads):
    b, n, c = x.shape
    dh = c // num_heads
    hdim = lp["w1"].shape[2]
    vec = lp["vec"][li]
    g1, be1, bp = vec[0, :c], vec[1, :c], vec[2, :c]
    g2, be2 = vec[3, :c], vec[4, :c]
    b1, b2 = vec[5, :hdim], vec[6, :c]

    xn = _layernorm_f32(x, g1, be1)
    wqkv = lp["wqkv"][li].astype(jnp.float32)
    q = xn @ wqkv[:, :c]
    kv = (xn @ wqkv[:, c:]).reshape(b, n, 2, num_heads, dh)
    k, v = kv[:, :, 0], kv[:, :, 1]
    qr = q.reshape(b, n, num_heads, dh)
    att = jnp.einsum("bnhd,bmhd->bnmh", qr, k) * dh ** (-0.5)
    att = jax.nn.softmax(att, axis=2)
    out = jnp.einsum("bnmh,bmhd->bnhd", att, v).reshape(b, n, c)
    x = x + (out @ lp["wp"][li].astype(jnp.float32) + bp)
    xn2 = _layernorm_f32(x, g2, be2)
    h1 = jax.nn.relu(xn2 @ lp["w1"][li].astype(jnp.float32) + b1)
    return x + (h1 @ lp["w2"][li].astype(jnp.float32) + b2)


def ref_transformer_mapper(x, params, clip_length, dim_embedding, num_heads):
    B = x.shape[0]
    h = (x @ params["lin_w"].astype(jnp.float32) + params["lin_b"][0])
    h = h.reshape(B, clip_length, dim_embedding)
    prefix = jnp.broadcast_to(
        params["prefix_const"][None], (B,) + params["prefix_const"].shape)
    z = jnp.concatenate([h, prefix], axis=1)
    for li in range(params["layers"]["wqkv"].shape[0]):
        z = _ref_layer(z, params["layers"], li, num_heads)
    return z[:, clip_length:]


# ---------------------------------------------------------------------------
if __name__ == "__main__":
    B = 2
    DIM_CLIP = 64
    DIM_EMB = 128
    CLIP_LEN = 8
    PREFIX_LEN = 8
    NUM_LAYERS = 2
    NUM_HEADS = 8          # Transformer(dim_embedding, 8, num_layers)
    MLP_RATIO = 2.0        # Transformer default

    key = jax.random.PRNGKey(0)
    kx, kp = jax.random.split(key)
    x = jax.random.normal(kx, (B, DIM_CLIP), dtype=jnp.float32)
    params = init_params(
        kp, DIM_CLIP, DIM_EMB, CLIP_LEN, PREFIX_LEN, NUM_LAYERS, NUM_HEADS, MLP_RATIO
    )

    out = transformer_mapper(x, params, CLIP_LEN, DIM_EMB, NUM_HEADS)
    out = jax.block_until_ready(out)

    ref = ref_transformer_mapper(x, params, CLIP_LEN, DIM_EMB, NUM_HEADS)
    ref = jax.block_until_ready(ref)

    assert out.shape == (B, PREFIX_LEN, DIM_EMB)
    # bf16 MXU inputs + approximate EUP reciprocal (softmax denominator) vs a
    # pure-f32 reference -> loose but deterministic tolerance.
    np.testing.assert_allclose(np.asarray(out), np.asarray(ref), rtol=2e-2, atol=2e-2)

    print("KERNEL_OK")
</pallas_src>

<mosaic_0001>
module attributes {stable_mosaic.version = 11 : i64} {
  func.func @mapper_linear_kernel(%arg0: i32, %arg1: memref<8x64xf32, #tpu.memory_space<vmem>>, %arg2: memref<64x1024xbf16, #tpu.memory_space<vmem>>, %arg3: memref<1x1024xf32, #tpu.memory_space<vmem>>, %arg4: memref<8x1024xf32, #tpu.memory_space<vmem>>) attributes {dimension_semantics = [#tpu.dimension_semantics<parallel>], iteration_bounds = array<i64: 1>, scalar_prefetch = 0 : i64, scratch_operands = 0 : i64, tpu.core_type = #tpu.core_type<tc>, window_params = [{pipeline_mode = #tpu.pipeline_mode<synchronous>, transform_indices = @transform_0, window_bounds = array<i64: 8, 64>}, {transform_indices = @transform_1, window_bounds = array<i64: 64, 1024>}, {transform_indices = @transform_2, window_bounds = array<i64: 1, 1024>}, {transform_indices = @transform_3, window_bounds = array<i64: 8, 1024>}]} {
    %c0 = arith.constant 0 : index
    %c0_0 = arith.constant 0 : index
    %0 = vector.load %arg1[%c0, %c0_0] : memref<8x64xf32, #tpu.memory_space<vmem>>, vector<8x64xf32>
    %1 = arith.truncf %0 : vector<8x64xf32> to vector<8x64xbf16>
    %c0_1 = arith.constant 0 : index
    %c0_2 = arith.constant 0 : index
    %2 = vector.load %arg2[%c0_1, %c0_2] : memref<64x1024xbf16, #tpu.memory_space<vmem>>, vector<64x1024xbf16>
    %cst = arith.constant dense<0.000000e+00> : vector<8x1024xf32>
    %3 = tpu.matmul %1, %2, %cst {dimension_numbers = #tpu.dot_dimension_numbers<[1], [0], [0], [1], [0, 0, 1, 1], [], []>} : vector<8x64xbf16>, vector<64x1024xbf16>, vector<8x1024xf32> -> vector<8x1024xf32>
    %c0_3 = arith.constant 0 : index
    %c0_4 = arith.constant 0 : index
    %4 = vector.load %arg3[%c0_3, %c0_4] : memref<1x1024xf32, #tpu.memory_space<vmem>>, vector<1x1024xf32>
    %5 = vector.broadcast %4 : vector<1x1024xf32> to vector<8x1024xf32>
    %6 = arith.addf %3, %5 : vector<8x1024xf32>
    %c0_5 = arith.constant 0 : index
    %c0_6 = arith.constant 0 : index
    %7 = vector.load %arg4[%c0_5, %c0_6] : memref<8x1024xf32, #tpu.memory_space<vmem>>, vector<8x1024xf32>
    tpu.vector_store %arg4[%c0_5, %c0_6], %6 {strides = array<i32>} : memref<8x1024xf32, #tpu.memory_space<vmem>>, vector<8x1024xf32>,
    return
  }
  func.func @transform_0(%arg0: i32) -> (i32, i32) {
    %c0_i32 = arith.constant 0 : i32
    %c0_i32_0 = arith.constant 0 : i32
    %c0_i32_1 = arith.constant 0 : i32
    return %c0_i32, %c0_i32_0 : i32, i32
  }
  func.func @transform_1(%arg0: i32) -> (i32, i32) {
    %c0_i32 = arith.constant 0 : i32
    %c0_i32_0 = arith.constant 0 : i32
    return %c0_i32, %arg0 : i32, i32
  }
  func.func @transform_2(%arg0: i32) -> (i32, i32) {
    %c0_i32 = arith.constant 0 : i32
    %c0_i32_0 = arith.constant 0 : i32
    return %c0_i32, %arg0 : i32, i32
  }
  func.func @transform_3(%arg0: i32) -> (i32, i32) {
    %c0_i32 = arith.constant 0 : i32
    %c0_i32_0 = arith.constant 0 : i32
    return %c0_i32, %arg0 : i32, i32
  }
}

</mosaic_0001>

<llo_original>
// kernel: tpu_custom_call.1
$region0: #{tpu_custom_call.1}
  #allocation0 [shape = 'u32[]', space=smem, size = 0x4, offset = 0x4, fixed_abs, tag = 'smem constant byte address 0x4 - core index']
  #allocation1 [shape = 'u32[144,128]{1,0:T(1,128)}', space=vmem, size = 0x12000, scoped, tag = 'internal scratch']
  %s0 = inlined_call_operand.hbm [shape: f32[8,64], index: 0, kind: input, shape index: {}]
  %s1 = inlined_call_operand.hbm [shape: bf16[64,1024], index: 1, kind: input, shape index: {}]
  %s2 = inlined_call_operand.hbm [shape: f32[1,1024], index: 2, kind: input, shape index: {}]
  %s3 = inlined_call_operand.hbm [shape: f32[8,1024], index: 3, kind: output, shape index: {}]
  %s4 = sld [smem:[#allocation0]]
  $region34: #{tpu_custom_call.1} parent=0
    _
  %s6 = ssub.s32 1, %s4
  %s7 = scalar_select 0, %s6, %s4
  $region1: #{tpu_custom_call.1} parent=0
    #allocation2 [shape = 'u8[4096]{0}', space=vmem, size = 0x1000, scoped, tag = 'input window, operand 0, single buffered']
    #allocation3 [shape = 's32[1]{0}', space=sflag, size = 0x4, scoped, tag = 'scoped memory for tpu_custom_call.1']
    #allocation4 [shape = 's32[1]{0}', space=sflag, size = 0x4, scoped, tag = 'scoped memory for tpu_custom_call.1']
    #allocation5 [shape = 'u8[131072]{0}', space=vmem, size = 0x20000, scoped, tag = 'input window, operand 1, single buffered']
    #allocation6 [shape = 's32[1]{0}', space=sflag, size = 0x4, scoped, tag = 'scoped memory for tpu_custom_call.1']
    #allocation7 [shape = 'u8[4096]{0}', space=vmem, size = 0x1000, scoped, tag = 'input window, operand 2, single buffered']
    #allocation8 [shape = 'u8[32768]{0}', space=vmem, size = 0x8000, scoped, tag = 'output window, operand 0, single buffered']
    %8 = vsyncpa [#allocation3], 0
    %9 = vsyncpa [#allocation6], 0
    %10 = vsyncpa [#allocation4], 0
    // Predicated region
    $region2: #{tpu_custom_call.1} parent=1 // pred_check
      _
    $region3: #{tpu_custom_call.1} parent=1 // pred_check_branch
      %12 = sbr.rel (0) target = $region5
    $region4: #{tpu_custom_call.1} parent=1 // pred_region
      %s14 = ssub.s32 128, 128
      %15 = vsyncadd [#allocation3], %s14
      %s17 = sshll.u32 [#allocation2], 4
      %s18 = int_to_ptr.vmem [resolvable:$true] %s17
      %20 = dma.hbm_to_vmem [thread:$0]  %s0, 128, %s18, [#allocation3]
    $region5: #{tpu_custom_call.1} parent=1 // pred_fallthru
      _
    // Predicated region
    $region6: #{tpu_custom_call.1} parent=1 // pred_check
      _
    $region7: #{tpu_custom_call.1} parent=1 // pred_check_branch
      %22 = sbr.rel (0) target = $region9
    $region8: #{tpu_custom_call.1} parent=1 // pred_region
      %s24 = ssub.s32 4096, 4096
      %25 = vsyncadd [#allocation6], %s24
      %s26 = sshll.u32 [#allocation5], 4
      %s27 = int_to_ptr.vmem [resolvable:$true] %s26
      %32 = dma.hbm_to_vmem [thread:$0]  %s1, 4096, %s27, [#allocation6], 512, 512, 32
    $region9: #{tpu_custom_call.1} parent=1 // pred_fallthru
      _
    // Predicated region
    $region10: #{tpu_custom_call.1} parent=1 // pred_check
      _
    $region11: #{tpu_custom_call.1} parent=1 // pred_check_branch
      %34 = sbr.rel (0) target = $region13
    $region12: #{tpu_custom_call.1} parent=1 // pred_region
      %s36 = ssub.s32 128, 128
      %37 = vsyncadd [#allocation6], %s36
      %s39 = sshll.u32 [#allocation7], 4
      %s40 = int_to_ptr.vmem [resolvable:$true] %s39
      %42 = dma.hbm_to_vmem [thread:$0]  %s2, 128, %s40, [#allocation6]
    $region13: #{tpu_custom_call.1} parent=1 // pred_fallthru
      _
    // Predicated region
    $region14: #{tpu_custom_call.1} parent=1 // pred_check
      _
    $region15: #{tpu_custom_call.1} parent=1 // pred_check_branch
      %44 = sbr.rel (0) target = $region17
    $region16: #{tpu_custom_call.1} parent=1 // pred_region
      %45 = dma.done [#allocation3], 128
    $region17: #{tpu_custom_call.1} parent=1 // pred_fallthru
      _
    // Predicated region
    $region18: #{tpu_custom_call.1} parent=1 // pred_check
      _
    $region19: #{tpu_custom_call.1} parent=1 // pred_check_branch
      %47 = sbr.rel (0) target = $region21
    $region20: #{tpu_custom_call.1} parent=1 // pred_region
      %48 = dma.done [#allocation6], 4096
    $region21: #{tpu_custom_call.1} parent=1 // pred_fallthru
      _
    // Predicated region
    $region22: #{tpu_custom_call.1} parent=1 // pred_check
      _
    $region23: #{tpu_custom_call.1} parent=1 // pred_check_branch
      %50 = sbr.rel (0) target = $region25
    $region24: #{tpu_custom_call.1} parent=1 // pred_region
      %51 = dma.done [#allocation6], 128
    $region25: #{tpu_custom_call.1} parent=1 // pred_fallthru
      _
    %v53 = vld [vmem:[#allocation2] sm:$0xff]
    %v54 = vpack.c.bf16 %v53, %v53
    %v55 = vld [vmem:[#allocation5] sm:$0xff]
    %v56 = vld [vmem:[#allocation5 + $0x8] sm:$0xff]
    %v57 = vld [vmem:[#allocation5 + $0x10] sm:$0xff]
    %v58 = vld [vmem:[#allocation5 + $0x18] sm:$0xff]
    %v59 = vld [vmem:[#allocation5 + $0x20] sm:$0xff]
    %v60 = vld [vmem:[#allocation5 + $0x28] sm:$0xff]
    %v61 = vld [vmem:[#allocation5 + $0x30] sm:$0xff]
    %v62 = vld [vmem:[#allocation5 + $0x38] sm:$0xff]
    %v63 = vld [vmem:[#allocation5 + $0x40] sm:$0xff]
    %v64 = vld [vmem:[#allocation5 + $0x48] sm:$0xff]
    %v65 = vld [vmem:[#allocation5 + $0x50] sm:$0xff]
    %v66 = vld [vmem:[#allocation5 + $0x58] sm:$0xff]
    %v67 = vld [vmem:[#allocation5 + $0x60] sm:$0xff]
    %v68 = vld [vmem:[#allocation5 + $0x68] sm:$0xff]
    %v69 = vld [vmem:[#allocation5 + $0x70] sm:$0xff]
    %v70 = vld [vmem:[#allocation5 + $0x78] sm:$0xff]
    %v71 = vld [vmem:[#allocation5 + $0x80] sm:$0xff]
    %v72 = vld [vmem:[#allocation5 + $0x88] sm:$0xff]
    %v73 = vld [vmem:[#allocation5 + $0x90] sm:$0xff]
    %v74 = vld [vmem:[#allocation5 + $0x98] sm:$0xff]
    %v75 = vld [vmem:[#allocation5 + $0xa0] sm:$0xff]
    %v76 = vld [vmem:[#allocation5 + $0xa8] sm:$0xff]
    %v77 = vld [vmem:[#allocation5 + $0xb0] sm:$0xff]
    %v78 = vld [vmem:[#allocation5 + $0xb8] sm:$0xff]
    %v79 = vld [vmem:[#allocation5 + $0xc0] sm:$0xff]
    %v80 = vld [vmem:[#allocation5 + $0xc8] sm:$0xff]
    %v81 = vld [vmem:[#allocation5 + $0xd0] sm:$0xff]
    %v82 = vld [vmem:[#allocation5 + $0xd8] sm:$0xff]
    %v83 = vld [vmem:[#allocation5 + $0xe0] sm:$0xff]
    %v84 = vld [vmem:[#allocation5 + $0xe8] sm:$0xff]
    %v85 = vld [vmem:[#allocation5 + $0xf0] sm:$0xff]
    %v86 = vld [vmem:[#allocation5 + $0xf8] sm:$0xff]
    %v87 = vld [vmem:[#allocation7] sm:$0xff]
    %v89 = vlaneseq
    %v90 = vshrl.u32 %v89, 7
    %v91 = vsub.s32 0, %v90
    %v92 = vrot.slane %v87, %v91
    %v93 = vlaneseq
    %v94 = vshrl.u32 %v93, 7
    %v95 = vsub.s32 1, %v94
    %v96 = vrot.slane %v87, %v95
    %v97 = vlaneseq
    %v98 = vshrl.u32 %v97, 7
    %v99 = vsub.s32 2, %v98
    %v100 = vrot.slane %v87, %v99
    %v101 = vlaneseq
    %v102 = vshrl.u32 %v101, 7
    %v103 = vsub.s32 3, %v102
    %v104 = vrot.slane %v87, %v103
    %v105 = vlaneseq
    %v106 = vshrl.u32 %v105, 7
    %v107 = vsub.s32 4, %v106
    %v108 = vrot.slane %v87, %v107
    %v109 = vlaneseq
    %v110 = vshrl.u32 %v109, 7
    %v111 = vsub.s32 5, %v110
    %v112 = vrot.slane %v87, %v111
    %v113 = vlaneseq
    %v114 = vshrl.u32 %v113, 7
    %v115 = vsub.s32 6, %v114
    %v116 = vrot.slane %v87, %v115
    %v117 = vlaneseq
    %v118 = vshrl.u32 %v117, 7
    %v119 = vsub.s32 7, %v118
    %v120 = vrot.slane %v87, %v119
    %v161 = vunpack.c.l.b16 %v55
    %v162 = vunpack.c.h.b16 %v55
    %v163 = vunpack.c.l.b16 %v56
    %v164 = vunpack.c.h.b16 %v56
    %v165 = vunpack.c.l.b16 %v57
    %v166 = vunpack.c.h.b16 %v57
    %v167 = vunpack.c.l.b16 %v58
    %v168 = vunpack.c.h.b16 %v58
    %v169 = vunpack.c.l.b16 %v59
    %v170 = vunpack.c.h.b16 %v59
    %v171 = vunpack.c.l.b16 %v60
    %v172 = vunpack.c.h.b16 %v60
    %v173 = vunpack.c.l.b16 %v61
    %v174 = vunpack.c.h.b16 %v61
    %v175 = vunpack.c.l.b16 %v62
    %v176 = vunpack.c.h.b16 %v62
    %v177 = vunpack.c.l.b16 %v63
    %v178 = vunpack.c.h.b16 %v63
    %v179 = vunpack.c.l.b16 %v64
    %v180 = vunpack.c.h.b16 %v64
    %v181 = vunpack.c.l.b16 %v65
    %v182 = vunpack.c.h.b16 %v65
    %v183 = vunpack.c.l.b16 %v66
    %v184 = vunpack.c.h.b16 %v66
    %v185 = vunpack.c.l.b16 %v67
    %v186 = vunpack.c.h.b16 %v67
    %v187 = vunpack.c.l.b16 %v68
    %v188 = vunpack.c.h.b16 %v68
    %v189 = vunpack.c.l.b16 %v69
    %v190 = vunpack.c.h.b16 %v69
    %v191 = vunpack.c.l.b16 %v70
    %v192 = vunpack.c.h.b16 %v70
    %v193 = vunpack.c.l.b16 %v71
    %v194 = vunpack.c.h.b16 %v71
    %v195 = vunpack.c.l.b16 %v72
    %v196 = vunpack.c.h.b16 %v72
    %v197 = vunpack.c.l.b16 %v73
    %v198 = vunpack.c.h.b16 %v73
    %v199 = vunpack.c.l.b16 %v74
    %v200 = vunpack.c.h.b16 %v74
    %v201 = vunpack.c.l.b16 %v75
    %v202 = vunpack.c.h.b16 %v75
    %v203 = vunpack.c.l.b16 %v76
    %v204 = vunpack.c.h.b16 %v76
    %v205 = vunpack.c.l.b16 %v77
    %v206 = vunpack.c.h.b16 %v77
    %v207 = vunpack.c.l.b16 %v78
    %v208 = vunpack.c.h.b16 %v78
    %v209 = vunpack.c.l.b16 %v79
    %v210 = vunpack.c.h.b16 %v79
    %v211 = vunpack.c.l.b16 %v80
    %v212 = vunpack.c.h.b16 %v80
    %v213 = vunpack.c.l.b16 %v81
    %v214 = vunpack.c.h.b16 %v81
    %v215 = vunpack.c.l.b16 %v82
    %v216 = vunpack.c.h.b16 %v82
    %v217 = vunpack.c.l.b16 %v83
    %v218 = vunpack.c.h.b16 %v83
    %v219 = vunpack.c.l.b16 %v84
    %v220 = vunpack.c.h.b16 %v84
    %v221 = vunpack.c.l.b16 %v85
    %v222 = vunpack.c.h.b16 %v85
    %v223 = vunpack.c.l.b16 %v86
    %v224 = vunpack.c.h.b16 %v86
    %v225 = vpack.c.b16 %v169, %v161
    %v226 = vpack.c.b16 %v170, %v162
    %v227 = vpack.c.b16 %v171, %v163
    %v228 = vpack.c.b16 %v172, %v164
    %v229 = vpack.c.b16 %v173, %v165
    %v230 = vpack.c.b16 %v174, %v166
    %v231 = vpack.c.b16 %v175, %v167
    %v232 = vpack.c.b16 %v176, %v168
    %v233 = vpack.c.b16 %v185, %v177
    %v234 = vpack.c.b16 %v186, %v178
    %v235 = vpack.c.b16 %v187, %v179
    %v236 = vpack.c.b16 %v188, %v180
    %v237 = vpack.c.b16 %v189, %v181
    %v238 = vpack.c.b16 %v190, %v182
    %v239 = vpack.c.b16 %v191, %v183
    %v240 = vpack.c.b16 %v192, %v184
    %v241 = vpack.c.b16 %v201, %v193
    %v242 = vpack.c.b16 %v202, %v194
    %v243 = vpack.c.b16 %v203, %v195
    %v244 = vpack.c.b16 %v204, %v196
    %v245 = vpack.c.b16 %v205, %v197
    %v246 = vpack.c.b16 %v206, %v198
    %v247 = vpack.c.b16 %v207, %v199
    %v248 = vpack.c.b16 %v208, %v200
    %v249 = vpack.c.b16 %v217, %v209
    %v250 = vpack.c.b16 %v218, %v210
    %v251 = vpack.c.b16 %v219, %v211
    %v252 = vpack.c.b16 %v220, %v212
    %v253 = vpack.c.b16 %v221, %v213
    %v254 = vpack.c.b16 %v222, %v214
    %v255 = vpack.c.b16 %v223, %v215
    %v256 = vpack.c.b16 %v224, %v216
    %vm289 = vcmask 523264
    %v291 = vsel %vm289, %v54, 0
    %293 = vmatprep.subr.bf16.mxu0 %v226
    %294 = vmatpush1.bf16.msra.mxu0 %v225
    %295 = vmatprep.subr.bf16.mxu0 %v234
    %296 = vmatpush1.bf16.msra.mxu0 %v233
    %297 = vmatprep.subr.bf16.mxu0 %v242
    %298 = vmatpush1.bf16.msra.mxu0 %v241
    %299 = vmatprep.subr.bf16.mxu0 %v250
    %300 = vmatpush1.bf16.msra.mxu0 %v249
    %301 = vmatprep.subr.bf16.mxu0 0
    %302 = vmatpush1.bf16.msra.mxu0 0
    %303 = vmatprep.subr.bf16.mxu0 0
    %304 = vmatpush1.bf16.msra.mxu0 0
    %305 = vmatprep.subr.bf16.mxu0 0
    %306 = vmatpush1.bf16.msra.mxu0 0
    %307 = vmatprep.subr.bf16.mxu0 0
    %308 = vmatpush1.bf16.msra.mxu0 0
    %309 = vmatprep.subr.bf16.mxu0 0
    %310 = vmatpush1.bf16.msra.mxu0 0
    %311 = vmatprep.subr.bf16.mxu0 0
    %312 = vmatpush1.bf16.msra.mxu0 0
    %313 = vmatprep.subr.bf16.mxu0 0
    %314 = vmatpush1.bf16.msra.mxu0 0
    %315 = vmatprep.subr.bf16.mxu0 0
    %316 = vmatpush1.bf16.msra.mxu0 0
    %317 = vmatprep.subr.bf16.mxu0 0
    %318 = vmatpush1.bf16.msra.mxu0 0
    %319 = vmatprep.subr.bf16.mxu0 0
    %320 = vmatpush1.bf16.msra.mxu0 0
    %321 = vmatprep.subr.bf16.mxu0 0
    %322 = vmatpush1.bf16.msra.mxu0 0
    %323 = vmatprep.subr.bf16.mxu0 0
    %324 = vmatpush1.bf16.msra.mxu0 0
    %325 = vmatprep.mubr.bf16.mxu0 0
    %326 = vmatmul.mubr.bf16.gmra.mrb[0].mxu0 %v291
    %v327 = vpop.f32.mrb[0].mxu0
    %v328 = vadd.f32 %v92, %v327
    %v329 = vpop.f32.mrb[0].mxu0
    %v330 = vadd.f32 %v96, %v329
    %v331 = vpop.f32.mrb[0].mxu0
    %v332 = vpop.f32.mrb[0].mxu0
    %333 = vdwg.mxu0
    %334 = vmatprep.subr.bf16.mxu0 %v228
    %335 = vmatpush1.bf16.msra.mxu0 %v227
    %336 = vmatprep.subr.bf16.mxu0 %v236
    %337 = vmatpush1.bf16.msra.mxu0 %v235
    %338 = vmatprep.subr.bf16.mxu0 %v244
    %339 = vmatpush1.bf16.msra.mxu0 %v243
    %340 = vmatprep.subr.bf16.mxu0 %v252
    %341 = vmatpush1.bf16.msra.mxu0 %v251
    %342 = vmatprep.subr.bf16.mxu0 0
    %343 = vmatpush1.bf16.msra.mxu0 0
    %344 = vmatprep.subr.bf16.mxu0 0
    %345 = vmatpush1.bf16.msra.mxu0 0
    %346 = vmatprep.subr.bf16.mxu0 0
    %347 = vmatpush1.bf16.msra.mxu0 0
    %348 = vmatprep.subr.bf16.mxu0 0
    %349 = vmatpush1.bf16.msra.mxu0 0
    %350 = vmatprep.subr.bf16.mxu0 0
    %351 = vmatpush1.bf16.msra.mxu0 0
    %352 = vmatprep.subr.bf16.mxu0 0
    %353 = vmatpush1.bf16.msra.mxu0 0
    %354 = vmatprep.subr.bf16.mxu0 0
    %355 = vmatpush1.bf16.msra.mxu0 0
    %356 = vmatprep.subr.bf16.mxu0 0
    %357 = vmatpush1.bf16.msra.mxu0 0
    %358 = vmatprep.subr.bf16.mxu0 0
    %359 = vmatpush1.bf16.msra.mxu0 0
    %360 = vmatprep.subr.bf16.mxu0 0
    %361 = vmatpush1.bf16.msra.mxu0 0
    %362 = vmatprep.subr.bf16.mxu0 0
    %363 = vmatpush1.bf16.msra.mxu0 0
    %364 = vmatprep.subr.bf16.mxu0 0
    %365 = vmatpush1.bf16.msra.mxu0 0
    %366 = vmatprep.mubr.bf16.mxu0 0
    %367 = vmatmul.mubr.bf16.gmra.mrb[0].mxu0 %v291
    %v368 = vpop.f32.mrb[0].mxu0
    %v369 = vadd.f32 %v100, %v368
    %v370 = vpop.f32.mrb[0].mxu0
    %v371 = vadd.f32 %v104, %v370
    %v372 = vpop.f32.mrb[0].mxu0
    %v373 = vpop.f32.mrb[0].mxu0
    %374 = vdwg.mxu0
    %375 = vmatprep.subr.bf16.mxu0 %v230
    %376 = vmatpush1.bf16.msra.mxu0 %v229
    %377 = vmatprep.subr.bf16.mxu0 %v238
    %378 = vmatpush1.bf16.msra.mxu0 %v237
    %379 = vmatprep.subr.bf16.mxu0 %v246
    %380 = vmatpush1.bf16.msra.mxu0 %v245
    %381 = vmatprep.subr.bf16.mxu0 %v254
    %382 = vmatpush1.bf16.msra.mxu0 %v253
    %383 = vmatprep.subr.bf16.mxu0 0
    %384 = vmatpush1.bf16.msra.mxu0 0
    %385 = vmatprep.subr.bf16.mxu0 0
    %386 = vmatpush1.bf16.msra.mxu0 0
    %387 = vmatprep.subr.bf16.mxu0 0
    %388 = vmatpush1.bf16.msra.mxu0 0
    %389 = vmatprep.subr.bf16.mxu0 0
    %390 = vmatpush1.bf16.msra.mxu0 0
    %391 = vmatprep.subr.bf16.mxu0 0
    %392 = vmatpush1.bf16.msra.mxu0 0
    %393 = vmatprep.subr.bf16.mxu0 0
    %394 = vmatpush1.bf16.msra.mxu0 0
    %395 = vmatprep.subr.bf16.mxu0 0
    %396 = vmatpush1.bf16.msra.mxu0 0
    %397 = vmatprep.subr.bf16.mxu0 0
    %398 = vmatpush1.bf16.msra.mxu0 0
    %399 = vmatprep.subr.bf16.mxu0 0
    %400 = vmatpush1.bf16.msra.mxu0 0
    %401 = vmatprep.subr.bf16.mxu0 0
    %402 = vmatpush1.bf16.msra.mxu0 0
    %403 = vmatprep.subr.bf16.mxu0 0
    %404 = vmatpush1.bf16.msra.mxu0 0
    %405 = vmatprep.subr.bf16.mxu0 0
    %406 = vmatpush1.bf16.msra.mxu0 0
    %407 = vmatprep.mubr.bf16.mxu0 0
    %408 = vmatmul.mubr.bf16.gmra.mrb[0].mxu0 %v291
    %v409 = vpop.f32.mrb[0].mxu0
    %v410 = vadd.f32 %v108, %v409
    %v411 = vpop.f32.mrb[0].mxu0
    %v412 = vadd.f32 %v112, %v411
    %v413 = vpop.f32.mrb[0].mxu0
    %v414 = vpop.f32.mrb[0].mxu0
    %415 = vdwg.mxu0
    %416 = vmatprep.subr.bf16.mxu0 %v232
    %417 = vmatpush1.bf16.msra.mxu0 %v231
    %418 = vmatprep.subr.bf16.mxu0 %v240
    %419 = vmatpush1.bf16.msra.mxu0 %v239
    %420 = vmatprep.subr.bf16.mxu0 %v248
    %421 = vmatpush1.bf16.msra.mxu0 %v247
    %422 = vmatprep.subr.bf16.mxu0 %v256
    %423 = vmatpush1.bf16.msra.mxu0 %v255
    %424 = vmatprep.subr.bf16.mxu0 0
    %425 = vmatpush1.bf16.msra.mxu0 0
    %426 = vmatprep.subr.bf16.mxu0 0
    %427 = vmatpush1.bf16.msra.mxu0 0
    %428 = vmatprep.subr.bf16.mxu0 0
    %429 = vmatpush1.bf16.msra.mxu0 0
    %430 = vmatprep.subr.bf16.mxu0 0
    %431 = vmatpush1.bf16.msra.mxu0 0
    %432 = vmatprep.subr.bf16.mxu0 0
    %433 = vmatpush1.bf16.msra.mxu0 0
    %434 = vmatprep.subr.bf16.mxu0 0
    %435 = vmatpush1.bf16.msra.mxu0 0
    %436 = vmatprep.subr.bf16.mxu0 0
    %437 = vmatpush1.bf16.msra.mxu0 0
    %438 = vmatprep.subr.bf16.mxu0 0
    %439 = vmatpush1.bf16.msra.mxu0 0
    %440 = vmatprep.subr.bf16.mxu0 0
    %441 = vmatpush1.bf16.msra.mxu0 0
    %442 = vmatprep.subr.bf16.mxu0 0
    %443 = vmatpush1.bf16.msra.mxu0 0
    %444 = vmatprep.subr.bf16.mxu0 0
    %445 = vmatpush1.bf16.msra.mxu0 0
    %446 = vmatprep.subr.bf16.mxu0 0
    %447 = vmatpush1.bf16.msra.mxu0 0
    %448 = vmatprep.mubr.bf16.mxu0 0
    %449 = vmatmul.mubr.bf16.gmra.mrb[0].mxu0 %v291
    %v450 = vpop.f32.mrb[0].mxu0
    %v451 = vadd.f32 %v116, %v450
    %v452 = vpop.f32.mrb[0].mxu0
    %v453 = vadd.f32 %v120, %v452
    %v454 = vpop.f32.mrb[0].mxu0
    %v455 = vpop.f32.mrb[0].mxu0
    %456 = vdwg.mxu0
    %457 = vst [vmem:[#allocation8] sm:$0xff] %v328
    %458 = vst [vmem:[#allocation8 + $0x8] sm:$0xff] %v330
    %459 = vst [vmem:[#allocation8 + $0x10] sm:$0xff] %v369
    %460 = vst [vmem:[#allocation8 + $0x18] sm:$0xff] %v371
    %461 = vst [vmem:[#allocation8 + $0x20] sm:$0xff] %v410
    %462 = vst [vmem:[#allocation8 + $0x28] sm:$0xff] %v412
    %463 = vst [vmem:[#allocation8 + $0x30] sm:$0xff] %v451
    %464 = vst [vmem:[#allocation8 + $0x38] sm:$0xff] %v453
    // Predicated region
    $region26: #{tpu_custom_call.1} parent=1 // pred_check
      _
    $region27: #{tpu_custom_call.1} parent=1 // pred_check_branch
      %466 = sbr.rel (0) target = $region29
    $region28: #{tpu_custom_call.1} parent=1 // pred_region
      %s468 = ssub.s32 1024, 1024
      %469 = vsyncadd [#allocation4], %s468
      %s471 = sshll.u32 [#allocation8], 4
      %s472 = int_to_ptr.vmem [resolvable:$true] %s471
      %474 = dma.vmem_to_hbm [thread:$0]  %s472, 1024, %s3, [#allocation4]
    $region29: #{tpu_custom_call.1} parent=1 // pred_fallthru
      _
    // Predicated region
    $region30: #{tpu_custom_call.1} parent=1 // pred_check
      _
    $region31: #{tpu_custom_call.1} parent=1 // pred_check_branch
      %476 = sbr.rel (0) target = $region33
    $region32: #{tpu_custom_call.1} parent=1 // pred_region
      %477 = dma.done [#allocation4], 1024
    $region33: #{tpu_custom_call.1} parent=1 // pred_fallthru
      _
    %478 = vsyncpa [#allocation3], 1
    %479 = vsyncpa [#allocation6], 1
    %480 = vsyncpa [#allocation4], 1

</llo_original>
